<compile_context>
chip_gen: v7x
topology: tpu7x:2x2x1
jax: 0.10.0
libtpu: 0.0.40
codegen_flags: <defaults>
</compile_context>

<pallas_src>
import functools

import jax
import jax.numpy as jnp
import numpy as np
from jax.experimental import pallas as pl
from jax.experimental.pallas import tpu as pltpu

LANES = 128
SUBLANES = 8
ROW_GRANULE = 16            # row padding granule (safe for f32/bf16/f16 packing)
RESIDENT_CHUNK_ROWS = 512   # 256 KiB (f32) per in-kernel chunk of the slab
STREAM_TILE_BYTES = 4 << 20  # ~4 MiB f32-equivalent streaming tiles


def _round_up(a, b):
    return -(-a // b) * b


def _vmem_budget_bytes():
    try:
        return int(pltpu.get_tpu_info().vmem_capacity_bytes)
    except Exception:
        return 64 << 20  # conservative fallback (v7x per-core VMEM)


# ---------------------------------------------------------------------------
# Resident path: whole (padded) array lives in a VMEM slab, read from HBM once.
# ---------------------------------------------------------------------------
def _resident_kernel(n, n_pad, chunk_rows, n_chunks,
                     x_hbm_ref, out_ref,
                     slab, copy_sem,
                     sd_acc, sdsq_acc, s1_acc, s1sq_acc, s2sq_acc):
    # Single HBM -> VMEM DMA for the whole input (1x footprint, no re-read).
    cp = pltpu.make_async_copy(x_hbm_ref, slab, copy_sem)
    cp.start()
    cp.wait()

    # Pivot for numerically robust variance (first = first valid element).
    c = slab[0, 0].astype(jnp.float32)

    sd_acc[...] = jnp.zeros_like(sd_acc)
    sdsq_acc[...] = jnp.zeros_like(sdsq_acc)
    s1_acc[...] = jnp.zeros_like(s1_acc)
    s1sq_acc[...] = jnp.zeros_like(s1sq_acc)
    s2sq_acc[...] = jnp.zeros_like(s2sq_acc)

    # ---- pass 1: sum(x - c), sum((x - c)^2) over the padded slab ----
    @pl.loop(0, n_chunks)
    def _(i):
        r0 = pl.multiple_of(i * chunk_rows, chunk_rows)
        xc = slab[pl.ds(r0, chunk_rows), :].astype(jnp.float32)
        d = (xc - c).reshape(-1, SUBLANES, LANES)
        sd_acc[...] += jnp.sum(d, axis=0)
        sdsq_acc[...] += jnp.sum(d * d, axis=0)

    # Correct for the n_pad zero-padding elements (each contributes -c, c^2).
    sd = jnp.sum(sd_acc[...]) + n_pad * c
    sdsq = jnp.sum(sdsq_acc[...]) - n_pad * c * c
    m = c + sd / n
    # var = sum((x - mean)^2) / (n-1) = (sum((x-c)^2) - n*(mean-c)^2) / (n-1).
    # n == 1 gives 0/0 = NaN, matching torch.std of a single element.
    var = (sdsq - sd * sd / n) / (n - 1.0)
    s = jnp.sqrt(jnp.maximum(var, 0.0))
    thr = m + 2.0 * s

    # ---- pass 2: masked statistics (padded zeros contribute exactly 0) ----
    @pl.loop(0, n_chunks)
    def _(i):
        r0 = pl.multiple_of(i * chunk_rows, chunk_rows)
        xc = slab[pl.ds(r0, chunk_rows), :].astype(jnp.float32)
        # Mask-multiply (not jnp.where) to preserve torch's NaN propagation.
        cor1 = xc * (xc < m).astype(jnp.float32)
        cor2 = xc * (xc >= thr).astype(jnp.float32)
        c1 = cor1.reshape(-1, SUBLANES, LANES)
        c2 = cor2.reshape(-1, SUBLANES, LANES)
        s1_acc[...] += jnp.sum(c1, axis=0)
        s1sq_acc[...] += jnp.sum(c1 * c1, axis=0)
        s2sq_acc[...] += jnp.sum(c2 * c2, axis=0)

    l2 = jnp.sum(s2sq_acc[...]) / n                      # MSE(cor2, zeros)
    tgt = 1.0 + 7.0 * l2                                 # constant target value
    # MSE(cor1, tgt) = (sum(cor1^2) - 2*tgt*sum(cor1)) / n + tgt^2
    l1 = (jnp.sum(s1sq_acc[...]) - 2.0 * tgt * jnp.sum(s1_acc[...])) / n + tgt * tgt
    out_ref[...] = jnp.full((1, 1), l1 / 8.0, jnp.float32)


def _corr_loss_resident(x2d, n_valid, chunk_rows, vmem_budget):
    rows = x2d.shape[0]
    n_chunks = rows // chunk_rows
    n_pad = rows * LANES - n_valid
    slab_bytes = rows * LANES * jnp.dtype(x2d.dtype).itemsize
    vmem_limit = int(min(vmem_budget, max(32 << 20, slab_bytes + (8 << 20))))

    kernel = functools.partial(_resident_kernel,
                               float(n_valid), float(n_pad),
                               int(chunk_rows), int(n_chunks))
    out = pl.pallas_call(
        kernel,
        out_shape=jax.ShapeDtypeStruct((1, 1), jnp.float32),
        grid_spec=pltpu.PrefetchScalarGridSpec(
            num_scalar_prefetch=0,
            grid=(1,),
            in_specs=[pl.BlockSpec(memory_space=pl.ANY)],   # raw HBM ref
            out_specs=pl.BlockSpec((1, 1), lambda i: (0, 0)),
            scratch_shapes=[
                pltpu.VMEM((rows, LANES), x2d.dtype),        # resident slab
                pltpu.SemaphoreType.DMA(()),
                pltpu.VMEM((SUBLANES, LANES), jnp.float32),  # sum(x - c)
                pltpu.VMEM((SUBLANES, LANES), jnp.float32),  # sum((x - c)^2)
                pltpu.VMEM((SUBLANES, LANES), jnp.float32),  # sum(cor1)
                pltpu.VMEM((SUBLANES, LANES), jnp.float32),  # sum(cor1^2)
                pltpu.VMEM((SUBLANES, LANES), jnp.float32),  # sum(cor2^2)
            ],
        ),
        compiler_params=pltpu.CompilerParams(
            dimension_semantics=("arbitrary",),
            vmem_limit_bytes=vmem_limit),
    )(x2d)
    return out[0, 0]


# ---------------------------------------------------------------------------
# Streaming path: two 'parallel' passes writing per-tile partial sums.
# ---------------------------------------------------------------------------
def _stream_stats_kernel(c_ref, x_ref, sd_ref, sdsq_ref):
    c = c_ref[0, 0]
    x = x_ref[...].astype(jnp.float32)
    d = (x - c).reshape(-1, SUBLANES, LANES)
    sd_ref[...] = jnp.sum(d, axis=0)[None]
    sdsq_ref[...] = jnp.sum(d * d, axis=0)[None]


def _stream_masked_kernel(mt_ref, x_ref, s1_ref, s1sq_ref, s2sq_ref):
    m = mt_ref[0, 0]
    thr = mt_ref[0, 1]
    x = x_ref[...].astype(jnp.float32)
    # Mask-multiply (not jnp.where) to preserve torch's NaN propagation.
    cor1 = x * (x < m).astype(jnp.float32)
    cor2 = x * (x >= thr).astype(jnp.float32)
    c1 = cor1.reshape(-1, SUBLANES, LANES)
    c2 = cor2.reshape(-1, SUBLANES, LANES)
    s1_ref[...] = jnp.sum(c1, axis=0)[None]
    s1sq_ref[...] = jnp.sum(c1 * c1, axis=0)[None]
    s2sq_ref[...] = jnp.sum(c2 * c2, axis=0)[None]


def _corr_loss_streaming(x2d, n_valid, tile_rows, vmem_budget):
    rows = x2d.shape[0]
    num_tiles = rows // tile_rows
    n = jnp.float32(n_valid)
    n_pad = jnp.float32(rows * LANES - n_valid)

    tile_bytes = tile_rows * LANES * jnp.dtype(x2d.dtype).itemsize
    vmem_limit = int(min(vmem_budget - (8 << 20),
                         max(48 << 20, 2 * tile_bytes + (24 << 20))))
    cparams = pltpu.CompilerParams(dimension_semantics=("parallel",),
                                   vmem_limit_bytes=vmem_limit)

    part_shape = jax.ShapeDtypeStruct((num_tiles, SUBLANES, LANES), jnp.float32)
    part_spec = pl.BlockSpec((1, SUBLANES, LANES), lambda t: (t, 0, 0))
    x_spec = pl.BlockSpec((tile_rows, LANES), lambda t: (t, 0))
    c_spec = pl.BlockSpec((1, 1), lambda t: (0, 0))
    mt_spec = pl.BlockSpec((1, 2), lambda t: (0, 0))

    # Pivot for the variance (first valid element), as a tiny device array.
    c = x2d[0, 0].astype(jnp.float32).reshape(1, 1)

    # ---- pass A: per-tile partial sum(x-c), sum((x-c)^2), 'parallel' grid ----
    sd_p, sdsq_p = pl.pallas_call(
        _stream_stats_kernel,
        out_shape=(part_shape, part_shape),
        grid_spec=pltpu.PrefetchScalarGridSpec(
            num_scalar_prefetch=0,
            grid=(num_tiles,),
            in_specs=[c_spec, x_spec],
            out_specs=(part_spec, part_spec)),
        compiler_params=cparams,
    )(c, x2d)

    # ---- finalize mean / std / threshold in plain JAX (tiny reductions) ----
    cs = c[0, 0]
    sd = jnp.sum(sd_p) + n_pad * cs               # correct for zero padding
    sdsq = jnp.sum(sdsq_p) - n_pad * cs * cs
    mean = cs + sd / n
    var = (sdsq - sd * sd / n) / (n - 1.0)        # unbiased (N-1), torch default
    std = jnp.sqrt(jnp.maximum(var, 0.0))
    thr = mean + 2.0 * std
    mt = jnp.stack([mean, thr]).reshape(1, 2)

    # ---- pass B: per-tile partial masked sums, 'parallel' grid ----
    s1_p, s1sq_p, s2sq_p = pl.pallas_call(
        _stream_masked_kernel,
        out_shape=(part_shape, part_shape, part_shape),
        grid_spec=pltpu.PrefetchScalarGridSpec(
            num_scalar_prefetch=0,
            grid=(num_tiles,),
            in_specs=[mt_spec, x_spec],
            out_specs=(part_spec, part_spec, part_spec)),
        compiler_params=cparams,
    )(mt, x2d)

    l2 = jnp.sum(s2sq_p) / n                      # MSE(cor2, zeros)
    tgt = 1.0 + 7.0 * l2
    l1 = (jnp.sum(s1sq_p) - 2.0 * tgt * jnp.sum(s1_p)) / n + tgt * tgt
    return l1 / 8.0


# ---------------------------------------------------------------------------
# Public wrapper
# ---------------------------------------------------------------------------
def corr_loss(cor, *, max_resident_bytes=None, stream_tile_rows=None):
    """Pallas TPU implementation of CorrLoss.forward. Returns a f32 scalar."""
    keep = tuple(jnp.dtype(t) for t in (jnp.float32, jnp.bfloat16, jnp.float16))
    if jnp.dtype(cor.dtype) not in keep:
        cor = cor.astype(jnp.float32)
    itemsize = jnp.dtype(cor.dtype).itemsize

    x = cor.reshape(-1)                            # metadata-only (row-major)
    n_valid = int(x.shape[0])

    budget = _vmem_budget_bytes()
    if max_resident_bytes is None:
        max_resident_bytes = budget - (16 << 20)   # headroom for scratch/compiler

    # Minimal lane-dense layout: rows = ceil(N/128) rounded to the row granule.
    rows_min = _round_up(max(1, _round_up(n_valid, LANES) // LANES), ROW_GRANULE)

    if rows_min * LANES * itemsize <= max_resident_bytes:
        # ----- resident path -----
        chunk_rows = rows_min if rows_min <= RESIDENT_CHUNK_ROWS else RESIDENT_CHUNK_ROWS
        rows = _round_up(rows_min, chunk_rows)
        n_padded = rows * LANES
        if n_padded != n_valid:
            x = jnp.pad(x, (0, n_padded - n_valid))    # skipped when already aligned
        x2d = x.reshape(rows, LANES)
        return _corr_loss_resident(x2d, n_valid, chunk_rows, budget)

    # ----- streaming path -----
    if stream_tile_rows is None:
        # ~4 MiB f32-equivalent tiles (bounds in-kernel f32 intermediates too).
        stream_tile_rows = max(ROW_GRANULE, STREAM_TILE_BYTES // (LANES * 4))
    num_tiles = -(-rows_min // stream_tile_rows)
    tile_rows = _round_up(-(-rows_min // num_tiles), ROW_GRANULE)
    rows = num_tiles * tile_rows                   # pad <= num_tiles*16 rows
    n_padded = rows * LANES
    if n_padded != n_valid:
        x = jnp.pad(x, (0, n_padded - n_valid))
    x2d = x.reshape(rows, LANES)
    return _corr_loss_streaming(x2d, n_valid, tile_rows, budget)


def corr_loss_ref(cor):
    """Pure-JAX reference mirroring the PyTorch module."""
    cor = cor.astype(jnp.float32)
    m = jnp.mean(cor)
    s = jnp.std(cor, ddof=1)                       # torch default: unbiased
    cor1 = cor * (cor < m)
    cor2 = cor * (cor >= m + 2.0 * s)
    l2 = jnp.mean(cor2 * cor2)                     # MSE(cor2, zeros)
    tgt = 1.0 + 7.0 * l2
    l1 = jnp.mean((cor1 - tgt) ** 2)               # MSE(cor1, tgt)
    return l1 / 8.0


if __name__ == "__main__":
    key = jax.random.PRNGKey(0)

    # cor: e.g. a [B, C, H, W] correlation volume (module is shape-agnostic).
    shapes = [(2, 4, 16, 16),      # 2048 elems, exact layout multiple
              (3, 5, 7, 11)]       # 1155 elems, exercises zero padding
    for i, shp in enumerate(shapes):
        cor = jax.random.normal(jax.random.fold_in(key, i), shp, dtype=jnp.float32)
        out = jax.block_until_ready(corr_loss(cor))
        ref = jax.block_until_ready(corr_loss_ref(cor))
        np.testing.assert_allclose(np.asarray(out), np.asarray(ref),
                                   rtol=1e-5, atol=1e-6)

    # bf16 input: native-dtype streaming, in-kernel upcast (resident path).
    cor_bf16 = jax.random.uniform(jax.random.fold_in(key, 7), (2, 4, 32, 32),
                                  minval=-1.0, maxval=1.0).astype(jnp.bfloat16)
    out = jax.block_until_ready(corr_loss(cor_bf16))
    ref = jax.block_until_ready(corr_loss_ref(cor_bf16))
    np.testing.assert_allclose(np.asarray(out), np.asarray(ref),
                               rtol=1e-4, atol=1e-5)

    # Force the large-input streaming path (parallel per-tile partial sums).
    cor_big = jax.random.uniform(jax.random.fold_in(key, 9), (2, 4, 64, 64),
                                 minval=-1.0, maxval=1.0)
    out = jax.block_until_ready(corr_loss(cor_big, max_resident_bytes=0,
                                          stream_tile_rows=64))
    ref = jax.block_until_ready(corr_loss_ref(cor_big))
    np.testing.assert_allclose(np.asarray(out), np.asarray(ref),
                               rtol=1e-5, atol=1e-6)

    print("KERNEL_OK")
</pallas_src>

<mosaic_0001>
module attributes {stable_mosaic.version = 11 : i64} {
  func.func @_resident_kernel(%arg0: i32, %arg1: memref<16x128xf32, #tpu.memory_space<any>>, %arg2: memref<1x1xf32, #tpu.memory_space<vmem>>, %arg3: memref<16x128xf32, #tpu.memory_space<vmem>>, %arg4: memref<!tpu.dma_semaphore, #tpu.memory_space<semaphore_mem>>, %arg5: memref<8x128xf32, #tpu.memory_space<vmem>>, %arg6: memref<8x128xf32, #tpu.memory_space<vmem>>, %arg7: memref<8x128xf32, #tpu.memory_space<vmem>>, %arg8: memref<8x128xf32, #tpu.memory_space<vmem>>, %arg9: memref<8x128xf32, #tpu.memory_space<vmem>>) attributes {dimension_semantics = [#tpu.dimension_semantics<arbitrary>], iteration_bounds = array<i64: 1>, scalar_prefetch = 0 : i64, scratch_operands = 7 : i64, tpu.core_type = #tpu.core_type<tc>, window_params = [{}, {pipeline_mode = #tpu.pipeline_mode<synchronous>, transform_indices = @transform_1, window_bounds = array<i64: 1, 1>}]} {
    tpu.enqueue_dma source(%arg1 : memref<16x128xf32, #tpu.memory_space<any>>) target(%arg3 : memref<16x128xf32, #tpu.memory_space<vmem>>) target_semaphore(%arg4 : memref<!tpu.dma_semaphore, #tpu.memory_space<semaphore_mem>>)
    tpu.wait_dma2 semaphore(%arg4 : memref<!tpu.dma_semaphore, #tpu.memory_space<semaphore_mem>>) src(%arg1 : memref<16x128xf32, #tpu.memory_space<any>>) dst(%arg3 : memref<16x128xf32, #tpu.memory_space<vmem>>)
    %c0 = arith.constant 0 : index
    %c0_0 = arith.constant 0 : index
    %0 = vector.load %arg3[%c0, %c0_0] : memref<16x128xf32, #tpu.memory_space<vmem>>, vector<1x1xf32>
    %1 = vector.extract %0[0, 0] : f32 from vector<1x1xf32>
    %cst = arith.constant 0.000000e+00 : f32
    %2 = vector.broadcast %cst : f32 to vector<8x128xf32>
    %c0_1 = arith.constant 0 : index
    %c0_2 = arith.constant 0 : index
    %3 = vector.load %arg5[%c0_1, %c0_2] : memref<8x128xf32, #tpu.memory_space<vmem>>, vector<8x128xf32>
    tpu.vector_store %arg5[%c0_1, %c0_2], %2 {strides = array<i32>} : memref<8x128xf32, #tpu.memory_space<vmem>>, vector<8x128xf32>,
    %cst_3 = arith.constant 0.000000e+00 : f32
    %4 = vector.broadcast %cst_3 : f32 to vector<8x128xf32>
    %c0_4 = arith.constant 0 : index
    %c0_5 = arith.constant 0 : index
    %5 = vector.load %arg6[%c0_4, %c0_5] : memref<8x128xf32, #tpu.memory_space<vmem>>, vector<8x128xf32>
    tpu.vector_store %arg6[%c0_4, %c0_5], %4 {strides = array<i32>} : memref<8x128xf32, #tpu.memory_space<vmem>>, vector<8x128xf32>,
    %cst_6 = arith.constant 0.000000e+00 : f32
    %6 = vector.broadcast %cst_6 : f32 to vector<8x128xf32>
    %c0_7 = arith.constant 0 : index
    %c0_8 = arith.constant 0 : index
    %7 = vector.load %arg7[%c0_7, %c0_8] : memref<8x128xf32, #tpu.memory_space<vmem>>, vector<8x128xf32>
    tpu.vector_store %arg7[%c0_7, %c0_8], %6 {strides = array<i32>} : memref<8x128xf32, #tpu.memory_space<vmem>>, vector<8x128xf32>,
    %cst_9 = arith.constant 0.000000e+00 : f32
    %8 = vector.broadcast %cst_9 : f32 to vector<8x128xf32>
    %c0_10 = arith.constant 0 : index
    %c0_11 = arith.constant 0 : index
    %9 = vector.load %arg8[%c0_10, %c0_11] : memref<8x128xf32, #tpu.memory_space<vmem>>, vector<8x128xf32>
    tpu.vector_store %arg8[%c0_10, %c0_11], %8 {strides = array<i32>} : memref<8x128xf32, #tpu.memory_space<vmem>>, vector<8x128xf32>,
    %cst_12 = arith.constant 0.000000e+00 : f32
    %10 = vector.broadcast %cst_12 : f32 to vector<8x128xf32>
    %c0_13 = arith.constant 0 : index
    %c0_14 = arith.constant 0 : index
    %11 = vector.load %arg9[%c0_13, %c0_14] : memref<8x128xf32, #tpu.memory_space<vmem>>, vector<8x128xf32>
    tpu.vector_store %arg9[%c0_13, %c0_14], %10 {strides = array<i32>} : memref<8x128xf32, #tpu.memory_space<vmem>>, vector<8x128xf32>,
    %c0_i32 = arith.constant 0 : i32
    %c1_i32 = arith.constant 1 : i32
    %12 = arith.muli %c0_i32, %c1_i32 : i32
    %c0_i32_15 = arith.constant 0 : i32
    %13 = arith.addi %c0_i32_15, %12 : i32
    %c16_i32 = arith.constant 16 : i32
    %14 = arith.muli %13, %c16_i32 : i32
    %15 = tpu.assume_multiple %14, 16 : i32
    %16 = arith.index_cast %15 : i32 to index
    %c0_16 = arith.constant 0 : index
    %17 = vector.load %arg3[%16, %c0_16] : memref<16x128xf32, #tpu.memory_space<vmem>>, vector<16x128xf32>
    %18 = vector.broadcast %1 : f32 to vector<16x128xf32>
    %19 = arith.subf %17, %18 : vector<16x128xf32>
    %20 = vector.shape_cast %19 : vector<16x128xf32> to vector<2x8x128xf32>
    %c0_17 = arith.constant 0 : index
    %c0_18 = arith.constant 0 : index
    %21 = vector.load %arg5[%c0_17, %c0_18] : memref<8x128xf32, #tpu.memory_space<vmem>>, vector<8x128xf32>
    %cst_19 = arith.constant dense<0.000000e+00> : vector<8x128xf32>
    %22 = vector.multi_reduction <add>, %20, %cst_19 [0] : vector<2x8x128xf32> to vector<8x128xf32>
    %23 = arith.addf %21, %22 : vector<8x128xf32>
    %c0_20 = arith.constant 0 : index
    %c0_21 = arith.constant 0 : index
    %24 = vector.load %arg5[%c0_20, %c0_21] : memref<8x128xf32, #tpu.memory_space<vmem>>, vector<8x128xf32>
    tpu.vector_store %arg5[%c0_20, %c0_21], %23 {strides = array<i32>} : memref<8x128xf32, #tpu.memory_space<vmem>>, vector<8x128xf32>,
    %c0_22 = arith.constant 0 : index
    %c0_23 = arith.constant 0 : index
    %25 = vector.load %arg6[%c0_22, %c0_23] : memref<8x128xf32, #tpu.memory_space<vmem>>, vector<8x128xf32>
    %26 = arith.mulf %20, %20 : vector<2x8x128xf32>
    %cst_24 = arith.constant dense<0.000000e+00> : vector<8x128xf32>
    %27 = vector.multi_reduction <add>, %26, %cst_24 [0] : vector<2x8x128xf32> to vector<8x128xf32>
    %28 = arith.addf %25, %27 : vector<8x128xf32>
    %c0_25 = arith.constant 0 : index
    %c0_26 = arith.constant 0 : index
    %29 = vector.load %arg6[%c0_25, %c0_26] : memref<8x128xf32, #tpu.memory_space<vmem>>, vector<8x128xf32>
    tpu.vector_store %arg6[%c0_25, %c0_26], %28 {strides = array<i32>} : memref<8x128xf32, #tpu.memory_space<vmem>>, vector<8x128xf32>,
    %c1_i32_27 = arith.constant 1 : i32
    %c0_28 = arith.constant 0 : index
    %c0_29 = arith.constant 0 : index
    %30 = vector.load %arg5[%c0_28, %c0_29] : memref<8x128xf32, #tpu.memory_space<vmem>>, vector<8x128xf32>
    %31 = vector.shape_cast %30 : vector<8x128xf32> to vector<1x8x128xf32>
    %cst_30 = arith.constant dense<0.000000e+00> : vector<1xf32>
    %32 = vector.multi_reduction <add>, %31, %cst_30 [1, 2] : vector<1x8x128xf32> to vector<1xf32>
    %33 = vector.shape_cast %32 : vector<1xf32> to vector<1x1x1xf32>
    %34 = vector.extract %33[0, 0, 0] : f32 from vector<1x1x1xf32>
    %cst_31 = arith.constant 0.000000e+00 : f32
    %35 = arith.mulf %cst_31, %1 : f32
    %36 = arith.addf %34, %35 : f32
    %c0_32 = arith.constant 0 : index
    %c0_33 = arith.constant 0 : index
    %37 = vector.load %arg6[%c0_32, %c0_33] : memref<8x128xf32, #tpu.memory_space<vmem>>, vector<8x128xf32>
    %38 = vector.shape_cast %37 : vector<8x128xf32> to vector<1x8x128xf32>
    %cst_34 = arith.constant dense<0.000000e+00> : vector<1xf32>
    %39 = vector.multi_reduction <add>, %38, %cst_34 [1, 2] : vector<1x8x128xf32> to vector<1xf32>
    %40 = vector.shape_cast %39 : vector<1xf32> to vector<1x1x1xf32>
    %41 = vector.extract %40[0, 0, 0] : f32 from vector<1x1x1xf32>
    %cst_35 = arith.constant 0.000000e+00 : f32
    %42 = arith.mulf %cst_35, %1 : f32
    %43 = arith.mulf %42, %1 : f32
    %44 = arith.subf %41, %43 : f32
    %cst_36 = arith.constant 2.048000e+03 : f32
    %45 = arith.divf %36, %cst_36 : f32
    %46 = arith.addf %1, %45 : f32
    %47 = arith.mulf %36, %36 : f32
    %cst_37 = arith.constant 2.048000e+03 : f32
    %48 = arith.divf %47, %cst_37 : f32
    %49 = arith.subf %44, %48 : f32
    %cst_38 = arith.constant 2.047000e+03 : f32
    %50 = arith.divf %49, %cst_38 : f32
    %cst_39 = arith.constant 0.000000e+00 : f32
    %51 = arith.maximumf %50, %cst_39 : f32
    %52 = math.sqrt %51 : f32
    %cst_40 = arith.constant 2.000000e+00 : f32
    %53 = arith.mulf %cst_40, %52 : f32
    %54 = arith.addf %46, %53 : f32
    %c0_i32_41 = arith.constant 0 : i32
    %c1_i32_42 = arith.constant 1 : i32
    %55 = arith.muli %c0_i32_41, %c1_i32_42 : i32
    %c0_i32_43 = arith.constant 0 : i32
    %56 = arith.addi %c0_i32_43, %55 : i32
    %c16_i32_44 = arith.constant 16 : i32
    %57 = arith.muli %56, %c16_i32_44 : i32
    %58 = tpu.assume_multiple %57, 16 : i32
    %59 = arith.index_cast %58 : i32 to index
    %c0_45 = arith.constant 0 : index
    %60 = vector.load %arg3[%59, %c0_45] : memref<16x128xf32, #tpu.memory_space<vmem>>, vector<16x128xf32>
    %61 = vector.broadcast %46 : f32 to vector<16x128xf32>
    %62 = arith.cmpf olt, %60, %61 : vector<16x128xf32>
    %63 = arith.extui %62 : vector<16x128xi1> to vector<16x128xi32>
    %64 = arith.sitofp %63 : vector<16x128xi32> to vector<16x128xf32>
    %65 = arith.mulf %60, %64 : vector<16x128xf32>
    %66 = vector.broadcast %54 : f32 to vector<16x128xf32>
    %67 = arith.cmpf oge, %60, %66 : vector<16x128xf32>
    %68 = arith.extui %67 : vector<16x128xi1> to vector<16x128xi32>
    %69 = arith.sitofp %68 : vector<16x128xi32> to vector<16x128xf32>
    %70 = arith.mulf %60, %69 : vector<16x128xf32>
    %71 = vector.shape_cast %65 : vector<16x128xf32> to vector<2x8x128xf32>
    %72 = vector.shape_cast %70 : vector<16x128xf32> to vector<2x8x128xf32>
    %c0_46 = arith.constant 0 : index
    %c0_47 = arith.constant 0 : index
    %73 = vector.load %arg7[%c0_46, %c0_47] : memref<8x128xf32, #tpu.memory_space<vmem>>, vector<8x128xf32>
    %cst_48 = arith.constant dense<0.000000e+00> : vector<8x128xf32>
    %74 = vector.multi_reduction <add>, %71, %cst_48 [0] : vector<2x8x128xf32> to vector<8x128xf32>
    %75 = arith.addf %73, %74 : vector<8x128xf32>
    %c0_49 = arith.constant 0 : index
    %c0_50 = arith.constant 0 : index
    %76 = vector.load %arg7[%c0_49, %c0_50] : memref<8x128xf32, #tpu.memory_space<vmem>>, vector<8x128xf32>
    tpu.vector_store %arg7[%c0_49, %c0_50], %75 {strides = array<i32>} : memref<8x128xf32, #tpu.memory_space<vmem>>, vector<8x128xf32>,
    %c0_51 = arith.constant 0 : index
    %c0_52 = arith.constant 0 : index
    %77 = vector.load %arg8[%c0_51, %c0_52] : memref<8x128xf32, #tpu.memory_space<vmem>>, vector<8x128xf32>
    %78 = arith.mulf %71, %71 : vector<2x8x128xf32>
    %cst_53 = arith.constant dense<0.000000e+00> : vector<8x128xf32>
    %79 = vector.multi_reduction <add>, %78, %cst_53 [0] : vector<2x8x128xf32> to vector<8x128xf32>
    %80 = arith.addf %77, %79 : vector<8x128xf32>
    %c0_54 = arith.constant 0 : index
    %c0_55 = arith.constant 0 : index
    %81 = vector.load %arg8[%c0_54, %c0_55] : memref<8x128xf32, #tpu.memory_space<vmem>>, vector<8x128xf32>
    tpu.vector_store %arg8[%c0_54, %c0_55], %80 {strides = array<i32>} : memref<8x128xf32, #tpu.memory_space<vmem>>, vector<8x128xf32>,
    %c0_56 = arith.constant 0 : index
    %c0_57 = arith.constant 0 : index
    %82 = vector.load %arg9[%c0_56, %c0_57] : memref<8x128xf32, #tpu.memory_space<vmem>>, vector<8x128xf32>
    %83 = arith.mulf %72, %72 : vector<2x8x128xf32>
    %cst_58 = arith.constant dense<0.000000e+00> : vector<8x128xf32>
    %84 = vector.multi_reduction <add>, %83, %cst_58 [0] : vector<2x8x128xf32> to vector<8x128xf32>
    %85 = arith.addf %82, %84 : vector<8x128xf32>
    %c0_59 = arith.constant 0 : index
    %c0_60 = arith.constant 0 : index
    %86 = vector.load %arg9[%c0_59, %c0_60] : memref<8x128xf32, #tpu.memory_space<vmem>>, vector<8x128xf32>
    tpu.vector_store %arg9[%c0_59, %c0_60], %85 {strides = array<i32>} : memref<8x128xf32, #tpu.memory_space<vmem>>, vector<8x128xf32>,
    %c1_i32_61 = arith.constant 1 : i32
    %c0_62 = arith.constant 0 : index
    %c0_63 = arith.constant 0 : index
    %87 = vector.load %arg9[%c0_62, %c0_63] : memref<8x128xf32, #tpu.memory_space<vmem>>, vector<8x128xf32>
    %88 = vector.shape_cast %87 : vector<8x128xf32> to vector<1x8x128xf32>
    %cst_64 = arith.constant dense<0.000000e+00> : vector<1xf32>
    %89 = vector.multi_reduction <add>, %88, %cst_64 [1, 2] : vector<1x8x128xf32> to vector<1xf32>
    %90 = vector.shape_cast %89 : vector<1xf32> to vector<1x1x1xf32>
    %91 = vector.extract %90[0, 0, 0] : f32 from vector<1x1x1xf32>
    %cst_65 = arith.constant 2.048000e+03 : f32
    %92 = arith.divf %91, %cst_65 : f32
    %cst_66 = arith.constant 7.000000e+00 : f32
    %93 = arith.mulf %cst_66, %92 : f32
    %cst_67 = arith.constant 1.000000e+00 : f32
    %94 = arith.addf %cst_67, %93 : f32
    %c0_68 = arith.constant 0 : index
    %c0_69 = arith.constant 0 : index
    %95 = vector.load %arg8[%c0_68, %c0_69] : memref<8x128xf32, #tpu.memory_space<vmem>>, vector<8x128xf32>
    %96 = vector.shape_cast %95 : vector<8x128xf32> to vector<1x8x128xf32>
    %cst_70 = arith.constant dense<0.000000e+00> : vector<1xf32>
    %97 = vector.multi_reduction <add>, %96, %cst_70 [1, 2] : vector<1x8x128xf32> to vector<1xf32>
    %98 = vector.shape_cast %97 : vector<1xf32> to vector<1x1x1xf32>
    %99 = vector.extract %98[0, 0, 0] : f32 from vector<1x1x1xf32>
    %cst_71 = arith.constant 2.000000e+00 : f32
    %100 = arith.mulf %cst_71, %94 : f32
    %c0_72 = arith.constant 0 : index
    %c0_73 = arith.constant 0 : index
    %101 = vector.load %arg7[%c0_72, %c0_73] : memref<8x128xf32, #tpu.memory_space<vmem>>, vector<8x128xf32>
    %102 = vector.shape_cast %101 : vector<8x128xf32> to vector<1x8x128xf32>
    %cst_74 = arith.constant dense<0.000000e+00> : vector<1xf32>
    %103 = vector.multi_reduction <add>, %102, %cst_74 [1, 2] : vector<1x8x128xf32> to vector<1xf32>
    %104 = vector.shape_cast %103 : vector<1xf32> to vector<1x1x1xf32>
    %105 = vector.extract %104[0, 0, 0] : f32 from vector<1x1x1xf32>
    %106 = arith.mulf %100, %105 : f32
    %107 = arith.subf %99, %106 : f32
    %cst_75 = arith.constant 2.048000e+03 : f32
    %108 = arith.divf %107, %cst_75 : f32
    %109 = arith.mulf %94, %94 : f32
    %110 = arith.addf %108, %109 : f32
    %cst_76 = arith.constant 8.000000e+00 : f32
    %111 = arith.divf %110, %cst_76 : f32
    %112 = vector.broadcast %111 : f32 to vector<1x1xf32>
    %c0_77 = arith.constant 0 : index
    %c0_78 = arith.constant 0 : index
    %113 = vector.load %arg2[%c0_77, %c0_78] : memref<1x1xf32, #tpu.memory_space<vmem>>, vector<1x1xf32>
    tpu.vector_store %arg2[%c0_77, %c0_78], %112 {strides = array<i32>} : memref<1x1xf32, #tpu.memory_space<vmem>>, vector<1x1xf32>,
    return
  }
  func.func @transform_1(%arg0: i32) -> (i32, i32) {
    %c0_i32 = arith.constant 0 : i32
    %c0_i32_0 = arith.constant 0 : i32
    %c0_i32_1 = arith.constant 0 : i32
    return %c0_i32, %c0_i32_0 : i32, i32
  }
}

</mosaic_0001>

<llo_original>
// kernel: tpu_custom_call.1
$region0: #{tpu_custom_call.1}
  #allocation0 [shape = 'u32[]', space=smem, size = 0x4, offset = 0x4, fixed_abs, tag = 'smem constant byte address 0x4 - core index']
  #allocation1 [shape = 'u32[144,128]{1,0:T(1,128)}', space=vmem, size = 0x12000, scoped, tag = 'internal scratch']
  #allocation2 [shape = 'f32[16,128]{1,0:T(8,128)}', space=vmem, size = 0x2000, scoped, tag = 'scratch operand']
  #allocation3 [shape = 's32[1]{0}', space=sflag, size = 0x4, scoped, tag = 'scratch operand']
  #allocation4 [shape = 'f32[8,128]{1,0:T(8,128)}', space=vmem, size = 0x1000, scoped, tag = 'scratch operand']
  #allocation5 [shape = 'f32[8,128]{1,0:T(8,128)}', space=vmem, size = 0x1000, scoped, tag = 'scratch operand']
  #allocation6 [shape = 'f32[8,128]{1,0:T(8,128)}', space=vmem, size = 0x1000, scoped, tag = 'scratch operand']
  #allocation7 [shape = 'f32[8,128]{1,0:T(8,128)}', space=vmem, size = 0x1000, scoped, tag = 'scratch operand']
  #allocation8 [shape = 'f32[8,128]{1,0:T(8,128)}', space=vmem, size = 0x1000, scoped, tag = 'scratch operand']
  #allocation11 [shape = 's32[]', space=sflag, size = 0x4, offset = 0, fixed_abs, tag = 'sflag constant byte address 0x0 - dummy sync flag']
  #allocation12 [shape = 's32[]', space=sflag, size = 0x4, offset = 0, fixed_abs, tag = 'sflag constant byte address 0x0 - dummy sync flag']
  #allocation13 [shape = 'u32[]', space=smem, size = 0x4, offset = 0x44, fixed_abs, tag = 'smem constant byte address 0x44 - assertion arg 0']
  #allocation14 [shape = 'u32[]', space=smem, size = 0x4, offset = 0x48, fixed_abs, tag = 'smem constant byte address 0x48 - assertion arg 1']
  %s0 = inlined_call_operand.hbm [shape: f32[16,128], index: 0, kind: input, shape index: {}]
  %s1 = inlined_call_operand.hbm [shape: f32[1,1], index: 1, kind: output, shape index: {}]
  %s2 = sld [smem:[#allocation0]]
  $region14: #{tpu_custom_call.1} parent=0
    _
  %s4 = ssub.s32 1, %s2
  %s5 = scalar_select 0, %s4, %s2
  $region1: #{tpu_custom_call.1} parent=0
    #allocation9 [shape = 'u8[512]{0}', space=vmem, size = 0x400, scoped, tag = 'output window, operand 0, single buffered']
    #allocation10 [shape = 's32[1]{0}', space=sflag, size = 0x4, scoped, tag = 'scoped memory for tpu_custom_call.1']
    %6 = vsyncpa [#allocation10], 0
    // Predicated region
    $region2: #{tpu_custom_call.1} parent=1 // pred_check
      _
    $region3: #{tpu_custom_call.1} parent=1 // pred_check_branch
      %8 = sbr.rel target = $region5
    $region4: #{tpu_custom_call.1} parent=1 // pred_region
      %9 = sst [smem:[#allocation13]] [#allocation12]
      %10 = sst [smem:[#allocation14]] [#allocation11]
    $region5: #{tpu_custom_call.1} parent=1 // pred_fallthru
      _
    %12 = shalt.err (0)
    %s14 = sshll.u32 [#allocation2], 4
    %s15 = int_to_ptr.vmem [resolvable:$true] %s14
    %17 = dma.hbm_to_vmem [thread:$0]  %s0, 256, %s15, [#allocation3]
    %s18 = smul.u32 16, 1
    %s19 = sshll.u32 %s18, 4
    %20 = dma.done [#allocation3], %s19
    %v21 = vld [vmem:[#allocation2] sm:$0x1]
    %s22 = vtos %v21
    %23 = vst [vmem:[#allocation4] sm:$0xff] 0.0
    %24 = vst [vmem:[#allocation5] sm:$0xff] 0.0
    %25 = vst [vmem:[#allocation6] sm:$0xff] 0.0
    %26 = vst [vmem:[#allocation7] sm:$0xff] 0.0
    %27 = vst [vmem:[#allocation8] sm:$0xff] 0.0
    %v28 = vld [vmem:[#allocation2] sm:$0xff]
    %v29 = vld [vmem:[#allocation2 + $0x8] sm:$0xff]
    %v30 = vstv %s22
    %v31 = vsub.f32 %v28, %v30
    %v32 = vsub.f32 %v29, %v30
    %v33 = vld [vmem:[#allocation4] sm:$0xff]
    %v34 = vadd.f32 %v31, %v32
    %v35 = vadd.f32 %v33, %v34
    %36 = vst [vmem:[#allocation4] sm:$0xff] %v35
    %v37 = vld [vmem:[#allocation5] sm:$0xff]
    %v38 = vmul.f32 %v31, %v31
    %v39 = vmul.f32 %v32, %v32
    %v40 = vadd.f32 %v38, %v39
    %v41 = vadd.f32 %v37, %v40
    %42 = vst [vmem:[#allocation5] sm:$0xff] %v41
    %v43 = vld [vmem:[#allocation4] sm:$0xff]
    %44 = vadd.xlane.f32.xlu0 %v43
    %v45 = vpop.xlane.xlu0 %44
    %v46 = vrot.slane %v45, 4
    %v47 = vadd.f32 %v45, %v46
    %v48 = vrot.slane %v47, 2
    %v49 = vadd.f32 %v47, %v48
    %v50 = vrot.slane %v49, 1
    %v51 = vadd.f32 %v49, %v50
    %s52 = vtos %v51
    %s53 = smul.f32 %s22, 0.0
    %s54 = sadd.f32 %s52, %s53
    %v55 = vld [vmem:[#allocation5] sm:$0xff]
    %56 = vadd.xlane.f32.xlu0 %v55
    %v57 = vpop.xlane.xlu0 %56
    %v58 = vrot.slane %v57, 4
    %v59 = vadd.f32 %v57, %v58
    %v60 = vrot.slane %v59, 2
    %v61 = vadd.f32 %v59, %v60
    %v62 = vrot.slane %v61, 1
    %v63 = vadd.f32 %v61, %v62
    %s64 = vtos %v63
    %s65 = smul.f32 %s53, %s22
    %s66 = ssub.f32 %s64, %s65
    %v67 = vrcp.pop 2048.0
    %s68 = vtos %v67
    %s69 = smul.f32 %s54, %s68
    %s70 = sadd.f32 %s22, %s69
    %s71 = smul.f32 %s54, %s54
    %v72 = vrcp.pop 2048.0
    %s73 = vtos %v72
    %s74 = smul.f32 %s71, %s73
    %s75 = ssub.f32 %s66, %s74
    %v76 = vrcp.pop 2047.0
    %s77 = vtos %v76
    %s78 = smul.f32 %s75, %s77
    %s79 = smax.f32 %s78, 0.0
    %v80 = vstv %s79
    %v81 = vrsqrt.pop %v80
    %v82 = vmul.f32 %v80, %v81
    %vm83 = vcmp.eq.f32.partialorder %v80, inf
    %v84 = vsel %vm83, %v80, %v82
    %vm85 = vcmp.eq.f32.partialorder %v80, 0.0
    %v86 = vand.u32 %v80, 2147483648
    %v87 = vsel %vm85, %v86, %v84
    %s88 = vtos %v87
    %s89 = smul.f32 %s88, 2.0
    %s90 = sadd.f32 %s70, %s89
    %v91 = vld [vmem:[#allocation2] sm:$0xff]
    %v92 = vld [vmem:[#allocation2 + $0x8] sm:$0xff]
    %v93 = vstv %s70
    %vm94 = vcmp.lt.f32.partialorder %v91, %v93
    %vm95 = vcmp.lt.f32.partialorder %v92, %v93
    %v96 = vsel %vm94, 1, 0
    %v97 = vsel %vm95, 1, 0
    %v98 = vcvt.s32.f32 %v96
    %v99 = vcvt.s32.f32 %v97
    %v100 = vmul.f32 %v91, %v98
    %v101 = vmul.f32 %v92, %v99
    %v102 = vstv %s90
    %vm103 = vcmp.ge.f32.partialorder %v91, %v102
    %vm104 = vcmp.ge.f32.partialorder %v92, %v102
    %v105 = vsel %vm103, 1, 0
    %v106 = vsel %vm104, 1, 0
    %v107 = vcvt.s32.f32 %v105
    %v108 = vcvt.s32.f32 %v106
    %v109 = vmul.f32 %v91, %v107
    %v110 = vmul.f32 %v92, %v108
    %v111 = vld [vmem:[#allocation6] sm:$0xff]
    %v112 = vadd.f32 %v100, %v101
    %v113 = vadd.f32 %v111, %v112
    %114 = vst [vmem:[#allocation6] sm:$0xff] %v113
    %v115 = vld [vmem:[#allocation7] sm:$0xff]
    %v116 = vmul.f32 %v100, %v100
    %v117 = vmul.f32 %v101, %v101
    %v118 = vadd.f32 %v116, %v117
    %v119 = vadd.f32 %v115, %v118
    %120 = vst [vmem:[#allocation7] sm:$0xff] %v119
    %v121 = vld [vmem:[#allocation8] sm:$0xff]
    %v122 = vmul.f32 %v109, %v109
    %v123 = vmul.f32 %v110, %v110
    %v124 = vadd.f32 %v122, %v123
    %v125 = vadd.f32 %v121, %v124
    %126 = vst [vmem:[#allocation8] sm:$0xff] %v125
    %v127 = vld [vmem:[#allocation8] sm:$0xff]
    %128 = vadd.xlane.f32.xlu0 %v127
    %v129 = vpop.xlane.xlu0 %128
    %v130 = vrot.slane %v129, 4
    %v131 = vadd.f32 %v129, %v130
    %v132 = vrot.slane %v131, 2
    %v133 = vadd.f32 %v131, %v132
    %v134 = vrot.slane %v133, 1
    %v135 = vadd.f32 %v133, %v134
    %s136 = vtos %v135
    %v137 = vrcp.pop 2048.0
    %s138 = vtos %v137
    %s139 = smul.f32 %s136, %s138
    %s140 = smul.f32 %s139, 7.0
    %s141 = sadd.f32 %s140, 1.0
    %v142 = vld [vmem:[#allocation7] sm:$0xff]
    %143 = vadd.xlane.f32.xlu0 %v142
    %v144 = vpop.xlane.xlu0 %143
    %v145 = vrot.slane %v144, 4
    %v146 = vadd.f32 %v144, %v145
    %v147 = vrot.slane %v146, 2
    %v148 = vadd.f32 %v146, %v147
    %v149 = vrot.slane %v148, 1
    %v150 = vadd.f32 %v148, %v149
    %s151 = vtos %v150
    %s152 = smul.f32 %s141, 2.0
    %v153 = vld [vmem:[#allocation6] sm:$0xff]
    %154 = vadd.xlane.f32.xlu0 %v153
    %v155 = vpop.xlane.xlu0 %154
    %v156 = vrot.slane %v155, 4
    %v157 = vadd.f32 %v155, %v156
    %v158 = vrot.slane %v157, 2
    %v159 = vadd.f32 %v157, %v158
    %v160 = vrot.slane %v159, 1
    %v161 = vadd.f32 %v159, %v160
    %s162 = vtos %v161
    %s163 = smul.f32 %s152, %s162
    %s164 = ssub.f32 %s151, %s163
    %v165 = vrcp.pop 2048.0
    %s166 = vtos %v165
    %s167 = smul.f32 %s164, %s166
    %s168 = smul.f32 %s141, %s141
    %s169 = sadd.f32 %s167, %s168
    %v170 = vrcp.pop 8.0
    %s171 = vtos %v170
    %s172 = smul.f32 %s169, %s171
    %v173 = vstv %s172
    %vm174 = vcmask 0
    %175 = vst.msk [vmem:[#allocation9] sm:$0x1] %vm174, %v173
    // Predicated region
    $region6: #{tpu_custom_call.1} parent=1 // pred_check
      _
    $region7: #{tpu_custom_call.1} parent=1 // pred_check_branch
      %177 = sbr.rel (0) target = $region9
    $region8: #{tpu_custom_call.1} parent=1 // pred_region
      %s179 = ssub.s32 16, 16
      %180 = vsyncadd [#allocation10], %s179
      %s182 = sshll.u32 [#allocation9], 4
      %s183 = int_to_ptr.vmem [resolvable:$true] %s182
      %185 = dma.vmem_to_hbm [thread:$0]  %s183, 16, %s1, [#allocation10]
    $region9: #{tpu_custom_call.1} parent=1 // pred_fallthru
      _
    // Predicated region
    $region10: #{tpu_custom_call.1} parent=1 // pred_check
      _
    $region11: #{tpu_custom_call.1} parent=1 // pred_check_branch
      %187 = sbr.rel (0) target = $region13
    $region12: #{tpu_custom_call.1} parent=1 // pred_region
      %188 = dma.done [#allocation10], 16
    $region13: #{tpu_custom_call.1} parent=1 // pred_fallthru
      _
    %189 = vsyncpa [#allocation10], 1
  %190 = vsyncmov [#allocation3]
  %s191 = vpop.sfrf %190
  %p192 = scmp.eq.s32.totalorder %s191, 0
  %p193 = pneg %p192
  %195 = shalt.err (%p193)

</llo_original>
